<compile_context>
chip_gen: v6e
topology: v6e:2x2x1
jax: 0.10.0
libtpu: 0.0.40
codegen_flags: <defaults>
</compile_context>

<pallas_src>
import functools

import jax
import jax.numpy as jnp
from jax.experimental import pallas as pl
from jax.experimental.pallas import tpu as pltpu


def _bert_embeddings_kernel(ids_ref,          # SMEM scalar-prefetch: flat word ids, (Npad,)
                            tt_blk_ref,       # (TB, 1) int32 token-type ids for this block
                            w_hbm_ref,        # (V, H) word table, raw HBM (pl.ANY)
                            tt_tab_ref,       # (2, H) f32, resident in VMEM
                            gamma_ref,        # (1, H) f32, resident
                            beta_ref,         # (1, H) f32, resident
                            o_ref,            # (TB, H) output block
                            gather_buf,       # (TB, H) VMEM scratch (word-table dtype)
                            sem,              # DMA semaphore
                            *, eps, tb):
    base = pl.program_id(0) * tb

    # ---- 1) Row gather: issue TB concurrent HBM->VMEM row DMAs ------------
    def issue(r, carry):
        row = ids_ref[base + r]
        pltpu.make_async_copy(w_hbm_ref.at[pl.ds(row, 1)],
                              gather_buf.at[pl.ds(r, 1)],
                              sem).start()
        return carry
    jax.lax.fori_loop(0, tb, issue, 0)

    # Drain: wait for all TB row copies (identical-size descriptors on the
    # shared semaphore, one wait per issued copy).
    def drain(r, carry):
        pltpu.make_async_copy(w_hbm_ref.at[pl.ds(0, 1)],
                              gather_buf.at[pl.ds(0, 1)],
                              sem).wait()
        return carry
    jax.lax.fori_loop(0, tb, drain, 0)

    w = gather_buf[...].astype(jnp.float32)                       # (TB, H)

    # ---- 2) Token-type embedding: 2-row resident table, vectorized select -
    tt_col = tt_blk_ref[...]                                      # (TB, 1), values in {0, 1}
    t = jnp.where(tt_col == 0, tt_tab_ref[0:1, :], tt_tab_ref[1:2, :])  # (TB, H)

    x = w + t                                                     # (TB, H) f32

    # ---- 3) TF-style LayerNorm (biased variance, eps inside the sqrt) -----
    mu = jnp.mean(x, axis=-1, keepdims=True)
    xc = x - mu
    var = jnp.mean(xc * xc, axis=-1, keepdims=True)
    inv = jax.lax.rsqrt(var + eps)                                # EUP rsqrt
    y = xc * inv * gamma_ref[...] + beta_ref[...]

    # TODO(synk): training-mode dropout omitted (eval / inference: identity).
    o_ref[...] = y.astype(o_ref.dtype)


def bert_embeddings(input_ids, token_type_ids, word_table, token_type_table,
                    ln_weight, ln_bias, *, eps=1e-12, block_tokens=256):
    """input_ids/token_type_ids: [B, S] int; word_table: [V, H];
    token_type_table: [2, H]; ln_weight/ln_bias: [H]. Returns [B, S, H]."""
    if token_type_ids is None:
        token_type_ids = jnp.zeros_like(input_ids)

    B, S = input_ids.shape
    V, H = word_table.shape
    N = B * S

    # Token-block size: multiple of 8 (f32 sublane packing), capped at N.
    tb = min(int(block_tokens), N)
    tb = max(8, ((tb + 7) // 8) * 8)
    n_blocks = -(-N // tb)
    n_pad = n_blocks * tb

    # Clamp ids (no OOB gather DMA possible) and pad N to a multiple of tb.
    flat_ids = jnp.clip(input_ids.reshape(N).astype(jnp.int32), 0, V - 1)
    flat_tt = jnp.clip(token_type_ids.reshape(N).astype(jnp.int32), 0, 1)
    if n_pad != N:
        flat_ids = jnp.pad(flat_ids, (0, n_pad - N))
        flat_tt = jnp.pad(flat_tt, (0, n_pad - N))
    tt_col = flat_tt.reshape(n_pad, 1)

    # Resident operands pre-cast to f32 once (LN math runs in f32).
    tt_tab32 = token_type_table.astype(jnp.float32)
    gamma32 = ln_weight.astype(jnp.float32).reshape(1, H)
    beta32 = ln_bias.astype(jnp.float32).reshape(1, H)

    itemsize = jnp.dtype(word_table.dtype).itemsize
    cost = pl.CostEstimate(
        flops=7 * n_pad * H,
        transcendentals=n_pad,
        bytes_accessed=(n_pad * H * itemsize      # gathered word-embedding rows
                        + n_pad * H * itemsize    # output
                        + 4 * H * 4 + n_pad * 8), # tiny tables / params / ids
    )

    kernel = functools.partial(_bert_embeddings_kernel, eps=eps, tb=tb)

    out = pl.pallas_call(
        kernel,
        out_shape=jax.ShapeDtypeStruct((n_pad, H), word_table.dtype),
        grid_spec=pltpu.PrefetchScalarGridSpec(
            num_scalar_prefetch=1,                            # flat word ids -> SMEM
            grid=(n_blocks,),
            in_specs=[
                pl.BlockSpec((tb, 1), lambda i, ids: (i, 0)),   # token-type ids block
                pl.BlockSpec(memory_space=pl.ANY),              # word table stays in HBM
                pl.BlockSpec((2, H), lambda i, ids: (0, 0)),    # tt table (resident)
                pl.BlockSpec((1, H), lambda i, ids: (0, 0)),    # gamma (resident)
                pl.BlockSpec((1, H), lambda i, ids: (0, 0)),    # beta (resident)
            ],
            out_specs=pl.BlockSpec((tb, H), lambda i, ids: (i, 0)),
            scratch_shapes=[
                pltpu.VMEM((tb, H), word_table.dtype),          # gather buffer
                pltpu.SemaphoreType.DMA(()),                    # shared gather sem
            ],
        ),
        compiler_params=pltpu.CompilerParams(
            dimension_semantics=("parallel",)),
        cost_estimate=cost,
    )(flat_ids, tt_col, word_table, tt_tab32, gamma32, beta32)

    return out[:N].reshape(B, S, H)


if __name__ == "__main__":
    # Small BERT-like config: batch=2, seq=8, vocab=32, hidden=128
    # (hidden = 128 so output rows are lane-dense on TPU).
    B, S, V, H = 2, 8, 32, 128
    eps = 1e-12

    key = jax.random.PRNGKey(0)
    k_ids, k_tt, k_w, k_t, k_g, k_b = jax.random.split(key, 6)

    input_ids = jax.random.randint(k_ids, (B, S), 0, V, dtype=jnp.int32)
    token_type_ids = jax.random.randint(k_tt, (B, S), 0, 2, dtype=jnp.int32)

    word_table = jax.random.normal(k_w, (V, H), dtype=jnp.float32) * 0.02
    token_type_table = jax.random.normal(k_t, (2, H), dtype=jnp.float32) * 0.02
    ln_weight = 1.0 + 0.1 * jax.random.normal(k_g, (H,), dtype=jnp.float32)
    ln_bias = 0.1 * jax.random.normal(k_b, (H,), dtype=jnp.float32)

    # Small block size for the demo so the grid has >1 step; production default
    # is block_tokens=256 (multiple of 8; use a multiple of 16 with bf16 tables).
    out = bert_embeddings(input_ids, token_type_ids, word_table,
                          token_type_table, ln_weight, ln_bias,
                          eps=eps, block_tokens=8)
    out = jax.block_until_ready(out)

    # Plain-JAX reference (same semantics as the PyTorch module, eval mode).
    x = word_table[input_ids] + token_type_table[token_type_ids]
    u = x.mean(-1, keepdims=True)
    s = ((x - u) ** 2).mean(-1, keepdims=True)
    ref = ln_weight * ((x - u) / jnp.sqrt(s + eps)) + ln_bias

    assert out.shape == (B, S, H)
    err = float(jnp.max(jnp.abs(out - ref)))
    assert jnp.allclose(out, ref, atol=1e-5, rtol=1e-5), err

    print("KERNEL_OK")
</pallas_src>

<mosaic_0001>
module attributes {stable_mosaic.version = 11 : i64} {
  func.func @_bert_embeddings_kernel(%arg0: i32, %arg1: memref<16xi32, #tpu.memory_space<smem>>, %arg2: memref<8x1xi32, #tpu.memory_space<vmem>>, %arg3: memref<32x128xf32, #tpu.memory_space<any>>, %arg4: memref<2x128xf32, #tpu.memory_space<vmem>>, %arg5: memref<1x128xf32, #tpu.memory_space<vmem>>, %arg6: memref<1x128xf32, #tpu.memory_space<vmem>>, %arg7: memref<8x128xf32, #tpu.memory_space<vmem>>, %arg8: memref<8x128xf32, #tpu.memory_space<vmem>>, %arg9: memref<!tpu.dma_semaphore, #tpu.memory_space<semaphore_mem>>) attributes {dimension_semantics = [#tpu.dimension_semantics<parallel>], iteration_bounds = array<i64: 2>, scalar_prefetch = 1 : i64, scratch_operands = 2 : i64, tpu.core_type = #tpu.core_type<tc>, window_params = [{transform_indices = @transform_0, window_bounds = array<i64: 8, 1>}, {}, {pipeline_mode = #tpu.pipeline_mode<synchronous>, transform_indices = @transform_2, window_bounds = array<i64: 2, 128>}, {pipeline_mode = #tpu.pipeline_mode<synchronous>, transform_indices = @transform_3, window_bounds = array<i64: 1, 128>}, {pipeline_mode = #tpu.pipeline_mode<synchronous>, transform_indices = @transform_4, window_bounds = array<i64: 1, 128>}, {transform_indices = @transform_5, window_bounds = array<i64: 8, 128>}]} {
    %c8_i32 = arith.constant 8 : i32
    %0 = arith.muli %arg0, %c8_i32 : i32
    %c0_i32 = arith.constant 0 : i32
    %c8_i32_0 = arith.constant 8 : i32
    %1 = arith.addi %c0_i32, %c8_i32_0 : i32
    %c1_i32 = arith.constant 1 : i32
    scf.for %arg10 = %c0_i32 to %1 step %c1_i32  : i32 {
      %40 = arith.addi %0, %arg10 : i32
      %41 = arith.index_cast %40 : i32 to index
      %42 = memref.load %arg1[%41] : memref<16xi32, #tpu.memory_space<smem>>
      %c0_i32_22 = arith.constant 0 : i32
      %43 = tpu.memref_slice %arg3[%42, %c0_i32_22] : memref<32x128xf32, #tpu.memory_space<any>> -> memref<1x128xf32, #tpu.memory_space<any>>
      %c0_i32_23 = arith.constant 0 : i32
      %44 = tpu.memref_slice %arg8[%arg10, %c0_i32_23] : memref<8x128xf32, #tpu.memory_space<vmem>> -> memref<1x128xf32, #tpu.memory_space<vmem>>
      tpu.enqueue_dma source(%43 : memref<1x128xf32, #tpu.memory_space<any>>) target(%44 : memref<1x128xf32, #tpu.memory_space<vmem>>) target_semaphore(%arg9 : memref<!tpu.dma_semaphore, #tpu.memory_space<semaphore_mem>>)
    }
    %c8_i32_1 = arith.constant 8 : i32
    %c0_i32_2 = arith.constant 0 : i32
    %c8_i32_3 = arith.constant 8 : i32
    %2 = arith.addi %c0_i32_2, %c8_i32_3 : i32
    %c1_i32_4 = arith.constant 1 : i32
    scf.for %arg10 = %c0_i32_2 to %2 step %c1_i32_4  : i32 {
      %c0_i32_22 = arith.constant 0 : i32
      %c0_i32_23 = arith.constant 0 : i32
      %40 = tpu.memref_slice %arg3[%c0_i32_22, %c0_i32_23] : memref<32x128xf32, #tpu.memory_space<any>> -> memref<1x128xf32, #tpu.memory_space<any>>
      %c0_i32_24 = arith.constant 0 : i32
      %c0_i32_25 = arith.constant 0 : i32
      %41 = tpu.memref_slice %arg8[%c0_i32_24, %c0_i32_25] : memref<8x128xf32, #tpu.memory_space<vmem>> -> memref<1x128xf32, #tpu.memory_space<vmem>>
      tpu.wait_dma2 semaphore(%arg9 : memref<!tpu.dma_semaphore, #tpu.memory_space<semaphore_mem>>) src(%40 : memref<1x128xf32, #tpu.memory_space<any>>) dst(%41 : memref<1x128xf32, #tpu.memory_space<vmem>>)
    }
    %c0 = arith.constant 0 : index
    %c0_5 = arith.constant 0 : index
    %3 = vector.load %arg8[%c0, %c0_5] : memref<8x128xf32, #tpu.memory_space<vmem>>, vector<8x128xf32>
    %c0_6 = arith.constant 0 : index
    %c0_7 = arith.constant 0 : index
    %4 = vector.load %arg2[%c0_6, %c0_7] : memref<8x1xi32, #tpu.memory_space<vmem>>, vector<8x1xi32>
    %c0_i32_8 = arith.constant 0 : i32
    %5 = vector.broadcast %c0_i32_8 : i32 to vector<8x1xi32>
    %6 = arith.cmpi eq, %4, %5 : vector<8x1xi32>
    %c0_9 = arith.constant 0 : index
    %c0_10 = arith.constant 0 : index
    %7 = vector.load %arg4[%c0_9, %c0_10] : memref<2x128xf32, #tpu.memory_space<vmem>>, vector<1x128xf32>
    %c1 = arith.constant 1 : index
    %c0_11 = arith.constant 0 : index
    %8 = vector.load %arg4[%c1, %c0_11] : memref<2x128xf32, #tpu.memory_space<vmem>>, vector<1x128xf32>
    %9 = vector.shape_cast %6 : vector<8x1xi1> to vector<8x1xi1>
    %10 = vector.broadcast %9 : vector<8x1xi1> to vector<8x128xi1>
    %11 = vector.shape_cast %7 : vector<1x128xf32> to vector<1x128xf32>
    %12 = vector.broadcast %11 : vector<1x128xf32> to vector<8x128xf32>
    %13 = vector.shape_cast %8 : vector<1x128xf32> to vector<1x128xf32>
    %14 = vector.broadcast %13 : vector<1x128xf32> to vector<8x128xf32>
    %15 = arith.select %10, %12, %14 : vector<8x128xi1>, vector<8x128xf32>
    %16 = arith.addf %3, %15 : vector<8x128xf32>
    %cst = arith.constant dense<0.000000e+00> : vector<8xf32>
    %17 = vector.multi_reduction <add>, %16, %cst [1] : vector<8x128xf32> to vector<8xf32>
    %18 = vector.shape_cast %17 : vector<8xf32> to vector<8x1xf32>
    %cst_12 = arith.constant 1.280000e+02 : f32
    %19 = vector.broadcast %cst_12 : f32 to vector<8x1xf32>
    %20 = arith.divf %18, %19 : vector<8x1xf32>
    %21 = vector.broadcast %20 : vector<8x1xf32> to vector<8x128xf32>
    %22 = arith.subf %16, %21 : vector<8x128xf32>
    %23 = arith.mulf %22, %22 : vector<8x128xf32>
    %cst_13 = arith.constant dense<0.000000e+00> : vector<8xf32>
    %24 = vector.multi_reduction <add>, %23, %cst_13 [1] : vector<8x128xf32> to vector<8xf32>
    %25 = vector.shape_cast %24 : vector<8xf32> to vector<8x1xf32>
    %cst_14 = arith.constant 1.280000e+02 : f32
    %26 = vector.broadcast %cst_14 : f32 to vector<8x1xf32>
    %27 = arith.divf %25, %26 : vector<8x1xf32>
    %cst_15 = arith.constant 9.99999996E-13 : f32
    %28 = vector.broadcast %cst_15 : f32 to vector<8x1xf32>
    %29 = arith.addf %27, %28 : vector<8x1xf32>
    %30 = math.rsqrt %29 : vector<8x1xf32>
    %31 = vector.broadcast %30 : vector<8x1xf32> to vector<8x128xf32>
    %32 = arith.mulf %22, %31 : vector<8x128xf32>
    %c0_16 = arith.constant 0 : index
    %c0_17 = arith.constant 0 : index
    %33 = vector.load %arg5[%c0_16, %c0_17] : memref<1x128xf32, #tpu.memory_space<vmem>>, vector<1x128xf32>
    %34 = vector.broadcast %33 : vector<1x128xf32> to vector<8x128xf32>
    %35 = arith.mulf %32, %34 : vector<8x128xf32>
    %c0_18 = arith.constant 0 : index
    %c0_19 = arith.constant 0 : index
    %36 = vector.load %arg6[%c0_18, %c0_19] : memref<1x128xf32, #tpu.memory_space<vmem>>, vector<1x128xf32>
    %37 = vector.broadcast %36 : vector<1x128xf32> to vector<8x128xf32>
    %38 = arith.addf %35, %37 : vector<8x128xf32>
    %c0_20 = arith.constant 0 : index
    %c0_21 = arith.constant 0 : index
    %39 = vector.load %arg7[%c0_20, %c0_21] : memref<8x128xf32, #tpu.memory_space<vmem>>, vector<8x128xf32>
    tpu.vector_store %arg7[%c0_20, %c0_21], %38 {strides = array<i32>} : memref<8x128xf32, #tpu.memory_space<vmem>>, vector<8x128xf32>,
    return
  }
  func.func @transform_0(%arg0: i32, %arg1: memref<16xi32, #tpu.memory_space<smem>>) -> (i32, i32) {
    %c0_i32 = arith.constant 0 : i32
    %c0_i32_0 = arith.constant 0 : i32
    return %arg0, %c0_i32 : i32, i32
  }
  func.func @transform_2(%arg0: i32, %arg1: memref<16xi32, #tpu.memory_space<smem>>) -> (i32, i32) {
    %c0_i32 = arith.constant 0 : i32
    %c0_i32_0 = arith.constant 0 : i32
    %c0_i32_1 = arith.constant 0 : i32
    return %c0_i32, %c0_i32_0 : i32, i32
  }
  func.func @transform_3(%arg0: i32, %arg1: memref<16xi32, #tpu.memory_space<smem>>) -> (i32, i32) {
    %c0_i32 = arith.constant 0 : i32
    %c0_i32_0 = arith.constant 0 : i32
    %c0_i32_1 = arith.constant 0 : i32
    return %c0_i32, %c0_i32_0 : i32, i32
  }
  func.func @transform_4(%arg0: i32, %arg1: memref<16xi32, #tpu.memory_space<smem>>) -> (i32, i32) {
    %c0_i32 = arith.constant 0 : i32
    %c0_i32_0 = arith.constant 0 : i32
    %c0_i32_1 = arith.constant 0 : i32
    return %c0_i32, %c0_i32_0 : i32, i32
  }
  func.func @transform_5(%arg0: i32, %arg1: memref<16xi32, #tpu.memory_space<smem>>) -> (i32, i32) {
    %c0_i32 = arith.constant 0 : i32
    %c0_i32_0 = arith.constant 0 : i32
    return %arg0, %c0_i32 : i32, i32
  }
}

</mosaic_0001>

<llo_original>
// kernel: tpu_custom_call.1
$region0: #{tpu_custom_call.1}
  #allocation0 [shape = 'u32[]', space=smem, size = 0x4, offset = 0x4, fixed_abs, tag = 'smem constant byte address 0x4 - core index']
  #allocation1 [shape = 'u32[144,128]{1,0:T(1,128)}', space=vmem, size = 0x12000, scoped, tag = 'internal scratch']
  #allocation2 [shape = 'f32[8,128]{1,0:T(8,128)}', space=vmem, size = 0x1000, scoped, tag = 'scratch operand']
  #allocation3 [shape = 's32[1]{0}', space=sflag, size = 0x4, scoped, tag = 'scratch operand']
  #allocation4 [shape = 's32[1]{0}', space=sflag, size = 0x4, scoped, tag = 'scoped memory for tpu_custom_call.1']
  #allocation5 [shape = 'u8[512]{0}', space=smem, size = 0x200, scoped, tag = 'prefetched SMEM operand 0']
  #allocation8 [shape = 's32[]', space=sflag, size = 0x4, offset = 0, fixed_abs, tag = 'sflag constant byte address 0x0 - dummy sync flag']
  #allocation9 [shape = 's32[]', space=sflag, size = 0x4, offset = 0, fixed_abs, tag = 'sflag constant byte address 0x0 - dummy sync flag']
  #allocation10 [shape = 'u32[]', space=smem, size = 0x4, offset = 0x44, fixed_abs, tag = 'smem constant byte address 0x44 - assertion arg 0']
  #allocation11 [shape = 'u32[]', space=smem, size = 0x4, offset = 0x48, fixed_abs, tag = 'smem constant byte address 0x48 - assertion arg 1']
  %s0 = inlined_call_operand.vmem [shape: s32[16], index: 0, kind: input, shape index: {}]
  %s1 = inlined_call_operand.vmem [shape: s32[16,1], index: 1, kind: input, shape index: {}]
  %s2 = inlined_call_operand.hbm [shape: f32[32,128], index: 2, kind: input, shape index: {}]
  %s3 = inlined_call_operand.vmem [shape: f32[2,128], index: 3, kind: input, shape index: {}]
  %s4 = inlined_call_operand.vmem [shape: f32[1,128], index: 4, kind: input, shape index: {}]
  %s5 = inlined_call_operand.vmem [shape: f32[1,128], index: 5, kind: input, shape index: {}]
  %s6 = inlined_call_operand.hbm [shape: f32[16,128], index: 6, kind: output, shape index: {}]
  %s7 = sld [smem:[#allocation0]]
  $region67: #{tpu_custom_call.1} parent=0
    _
  %s9 = ssub.s32 1, %s7
  %s10 = scalar_select 0, %s9, %s7
  %s11 = sshll.u32 %s0, 4
  %s12 = int_to_ptr.vmem [resolvable:$true] %s11
  %14 = dma.vmem_to_smem %s12, 16, [#allocation5], [#allocation4]
  %15 = dma.done [#allocation4], 16
  %16 = sfence
  $region1: #{tpu_custom_call.1} parent=0
    #allocation6 [shape = 'u8[8192]{0}', space=vmem, size = 0x2000, scoped, tag = 'output window, operand 0']
    #allocation7 [shape = 's32[2]{0}', space=sflag, size = 0x8, scoped, tag = 'scoped memory for tpu_custom_call.1']
    %17 = vsyncpa [#allocation7], 0
    %s18 = scalar_lea.sflag [#allocation7], 1
    %19 = vsyncpa %s18, 0
    loop: start=0, step=1, limit=4
    $region2: #{tpu_custom_call.1} parent=1 // loop_pre_header
      _
    $region3: #{tpu_custom_call.1} parent=1 // loop_header
      %s21 = sphi 0, %s25
      %p22 = scmp.ge.s32.totalorder %s21, 4
      %s31 = sphi 0, %s33
      %s34 = sphi 0, %s31
      %s35 = sphi 0, %s34
      %s51 = sphi 0, %s35
      %s55 = sphi 0, %s55
      %s57 = sphi 0, %s55
      %s58 = sphi 0, %s57
      %s72 = sphi 0, %s58
      %s76 = sphi 0, %s76
      %s78 = sphi 0, %s76
      %s79 = sphi 0, %s78
      %s93 = sphi 0, %s79
      %s97 = sphi 0, %s97
      %s99 = sphi 0, %s97
      %s100 = sphi 0, %s99
      %s114 = sphi 0, %s100
      %s120 = sphi 0, %s122
      %s123 = sphi 0, %s120
      %s124 = sphi 0, %s123
      %s140 = sphi 0, %s124
    $region4: #{tpu_custom_call.1} parent=1 // loop_header_branch
      %24 = sbr.rel (%p22) target = $region8
    $region5: #{tpu_custom_call.1} parent=1 // loop_body
      %s26 = ssub.s32 %s21, 1
      %s27 = ssub.s32 %s21, 2
      %s28 = sadd.s32 %s21, 1
      %s29 = ssub.s32 %s21, %s28
      %p30 = scmp.eq.s32.totalorder %s29, 0
      %s32 = sadd.s32 %s31, 1
      %s33 = scalar_select %p30, %s31, %s32
      %p36 = pneg %p30
      %p37 = scmp.eq.s32.totalorder %s21, 1
      %p38 = por %p36, %p37
      %p39 = scmp.ne.s32.totalorder %s31, %s34
      %p40 = scmp.eq.s32.totalorder %s21, 0
      %p41 = por %p39, %p40
      %p42 = scmp.ne.s32.totalorder %s31, %s34
      %p43 = scmp.eq.s32.totalorder %s26, 1
      %p44 = por %p42, %p43
      %p45 = scmp.ne.s32.totalorder %s34, %s35
      %p46 = scmp.eq.s32.totalorder %s26, 0
      %p47 = por %p45, %p46
      %p48 = scmp.ne.s32.totalorder %s34, %s35
      %p49 = scmp.eq.s32.totalorder %s27, 1
      %p50 = por %p48, %p49
      %p52 = scmp.ne.s32.totalorder %s35, %s51
      %p53 = scmp.eq.s32.totalorder %s27, 0
      %p54 = por %p52, %p53
      %s56 = sadd.s32 %s55, 1
      %p59 = scmp.eq.s32.totalorder %s21, 1
      %p60 = scmp.ne.s32.totalorder %s55, %s57
      %p61 = scmp.eq.s32.totalorder %s21, 0
      %p62 = por %p60, %p61
      %p63 = scmp.ne.s32.totalorder %s55, %s57
      %p64 = scmp.eq.s32.totalorder %s26, 1
      %p65 = por %p63, %p64
      %p66 = scmp.ne.s32.totalorder %s57, %s58
      %p67 = scmp.eq.s32.totalorder %s26, 0
      %p68 = por %p66, %p67
      %p69 = scmp.ne.s32.totalorder %s57, %s58
      %p70 = scmp.eq.s32.totalorder %s27, 1
      %p71 = por %p69, %p70
      %p73 = scmp.ne.s32.totalorder %s58, %s72
      %p74 = scmp.eq.s32.totalorder %s27, 0
      %p75 = por %p73, %p74
      %s77 = sadd.s32 %s76, 1
      %p80 = scmp.eq.s32.totalorder %s21, 1
      %p81 = scmp.ne.s32.totalorder %s76, %s78
      %p82 = scmp.eq.s32.totalorder %s21, 0
      %p83 = por %p81, %p82
      %p84 = scmp.ne.s32.totalorder %s76, %s78
      %p85 = scmp.eq.s32.totalorder %s26, 1
      %p86 = por %p84, %p85
      %p87 = scmp.ne.s32.totalorder %s78, %s79
      %p88 = scmp.eq.s32.totalorder %s26, 0
      %p89 = por %p87, %p88
      %p90 = scmp.ne.s32.totalorder %s78, %s79
      %p91 = scmp.eq.s32.totalorder %s27, 1
      %p92 = por %p90, %p91
      %p94 = scmp.ne.s32.totalorder %s79, %s93
      %p95 = scmp.eq.s32.totalorder %s27, 0
      %p96 = por %p94, %p95
      %s98 = sadd.s32 %s97, 1
      %p101 = scmp.eq.s32.totalorder %s21, 1
      %p102 = scmp.ne.s32.totalorder %s97, %s99
      %p103 = scmp.eq.s32.totalorder %s21, 0
      %p104 = por %p102, %p103
      %p105 = scmp.ne.s32.totalorder %s97, %s99
      %p106 = scmp.eq.s32.totalorder %s26, 1
      %p107 = por %p105, %p106
      %p108 = scmp.ne.s32.totalorder %s99, %s100
      %p109 = scmp.eq.s32.totalorder %s26, 0
      %p110 = por %p108, %p109
      %p111 = scmp.ne.s32.totalorder %s99, %s100
      %p112 = scmp.eq.s32.totalorder %s27, 1
      %p113 = por %p111, %p112
      %p115 = scmp.ne.s32.totalorder %s100, %s114
      %p116 = scmp.eq.s32.totalorder %s27, 0
      %p117 = por %p115, %p116
      %s118 = ssub.s32 %s21, %s28
      %p119 = scmp.eq.s32.totalorder %s118, 0
      %s121 = sadd.s32 %s120, 1
      %s122 = scalar_select %p119, %s120, %s121
      %p125 = pneg %p119
      %p126 = scmp.eq.s32.totalorder %s21, 1
      %p127 = por %p125, %p126
      %p128 = scmp.ne.s32.totalorder %s120, %s123
      %p129 = scmp.eq.s32.totalorder %s21, 0
      %p130 = por %p128, %p129
      %p131 = scmp.ne.s32.totalorder %s120, %s123
      %p132 = scmp.eq.s32.totalorder %s26, 1
      %p133 = por %p131, %p132
      %p134 = scmp.ne.s32.totalorder %s123, %s124
      %p135 = scmp.eq.s32.totalorder %s26, 0
      %p136 = por %p134, %p135
      %p137 = scmp.ne.s32.totalorder %s123, %s124
      %p138 = scmp.eq.s32.totalorder %s27, 1
      %p139 = por %p137, %p138
      %p141 = scmp.ne.s32.totalorder %s124, %s140
      %p142 = scmp.eq.s32.totalorder %s27, 0
      %p143 = por %p141, %p142
      %p144 = scmp.le.s32.totalorder 1, %s21
      %p145 = scmp.lt.s32.totalorder %s21, 3
      %p146 = pnand %p144, %p145
      %p147 = pneg %p146
      // Predicated region
      $region9: #{tpu_custom_call.1} parent=5 // pred_check
        _
      $region10: #{tpu_custom_call.1} parent=5 // pred_check_branch
        %149 = sbr.rel (%p146) target = $region12
      $region11: #{tpu_custom_call.1} parent=5 // pred_region
        %s150 = ssub.s32 %s21, 1
        // Predicated region
        $region13: #{tpu_custom_call.1} parent=11 // pred_check
          %p151 = pneg %p68
        $region14: #{tpu_custom_call.1} parent=11 // pred_check_branch
          %153 = sbr.rel (%p151) target = $region16
        $region15: #{tpu_custom_call.1} parent=11 // pred_region
          _
        $region16: #{tpu_custom_call.1} parent=11 // pred_fallthru
          _
        // Predicated region
        $region17: #{tpu_custom_call.1} parent=11 // pred_check
          %p154 = pneg %p89
        $region18: #{tpu_custom_call.1} parent=11 // pred_check_branch
          %156 = sbr.rel (%p154) target = $region20
        $region19: #{tpu_custom_call.1} parent=11 // pred_region
          _
        $region20: #{tpu_custom_call.1} parent=11 // pred_fallthru
          _
        // Predicated region
        $region21: #{tpu_custom_call.1} parent=11 // pred_check
          %p157 = pneg %p110
        $region22: #{tpu_custom_call.1} parent=11 // pred_check_branch
          %159 = sbr.rel (%p157) target = $region24
        $region23: #{tpu_custom_call.1} parent=11 // pred_region
          _
        $region24: #{tpu_custom_call.1} parent=11 // pred_fallthru
          _
      $region12: #{tpu_custom_call.1} parent=5 // pred_fallthru
        _
      %p160 = scmp.lt.s32.totalorder %s21, 2
      // Predicated region
      $region25: #{tpu_custom_call.1} parent=5 // pred_check
        %p161 = pneg %p160
      $region26: #{tpu_custom_call.1} parent=5 // pred_check_branch
        %163 = sbr.rel (%p161) target = $region28
      $region27: #{tpu_custom_call.1} parent=5 // pred_region
        // Predicated region
        $region29: #{tpu_custom_call.1} parent=27 // pred_check
          %p164 = pneg %p41
        $region30: #{tpu_custom_call.1} parent=27 // pred_check_branch
          %166 = sbr.rel (%p164) target = $region32
        $region31: #{tpu_custom_call.1} parent=27 // pred_region
          %p167 = scmp.lt.s32.totalorder %s21, 1
          %s168 = scalar_select %p167, %s21, 1
          %s169 = smul.addr %s168, 8
          %s170 = scalar_lea.vmem %s1, %s169
        $region32: #{tpu_custom_call.1} parent=27 // pred_fallthru
          _
      $region28: #{tpu_custom_call.1} parent=5 // pred_fallthru
        _
      %p171 = scmp.le.s32.totalorder 1, %s21
      %p172 = scmp.lt.s32.totalorder %s21, 3
      %p173 = pnand %p171, %p172
      %p174 = pneg %p173
      // Predicated region
      $region33: #{tpu_custom_call.1} parent=5 // pred_check
        _
      $region34: #{tpu_custom_call.1} parent=5 // pred_check_branch
        %176 = sbr.rel (%p173) target = $region36
      $region35: #{tpu_custom_call.1} parent=5 // pred_region
        %s177 = ssub.s32 %s21, 1
        %p178 = scmp.lt.s32.totalorder %s26, 1
        %s179 = scalar_select %p178, %s26, 1
        %s180 = smul.addr %s179, 8
        %s181 = scalar_lea.vmem %s1, %s180
        %p182 = pneg %p47
        %p183 = pneg %p44
        %p184 = pneg %p68
        %p185 = pneg %p65
        %p186 = pneg %p89
        %p187 = pneg %p86
        %p188 = pneg %p110
        %p189 = pneg %p107
        %p190 = pneg %p136
        %p191 = pneg %p133
        %s192 = sand.u32 %s123, 1
        %s193 = scalar_lea.sflag [#allocation7], %s192
        %s194 = sand.u32 %s123, 1
        %s195 = smul.addr %s194, 8
        %s196 = scalar_lea.vmem [#allocation6], %s195
        %p197 = scmp.lt.s32.totalorder %s26, 1
        %s198 = scalar_select %p197, %s26, 1
        %s199 = smul.addr %s198, 8
        %s200 = scalar_lea.vmem %s1, %s199
        %s201 = smul.u32 %s26, 8
        loop: start=0, step=1, limit=8
        $region37: #{tpu_custom_call.1} parent=35 // loop_pre_header
          _
        $region38: #{tpu_custom_call.1} parent=35 // loop_header
          %s203 = sphi 0, %s207
          %p204 = scmp.ge.s32.totalorder %s203, 8
        $region39: #{tpu_custom_call.1} parent=35 // loop_header_branch
          %206 = sbr.rel (%p204) target = $region43
        $region40: #{tpu_custom_call.1} parent=35 // loop_body
          %s208 = sadd.s32 %s201, %s203
          %s209 = sld [smem:[#allocation5 + %s208]]
          %s210 = smul.addr %s209, 16
          %s211 = scalar_lea.hbm %s2, %s210
          %s212 = scalar_lea.vmem [#allocation2], %s203
          // Predicated region
          $region44: #{tpu_custom_call.1} parent=40 // pred_check
            _
          $region45: #{tpu_custom_call.1} parent=40 // pred_check_branch
            %214 = sbr.rel target = $region47
          $region46: #{tpu_custom_call.1} parent=40 // pred_region
            %215 = sst [smem:[#allocation10]] [#allocation9]
            %216 = sst [smem:[#allocation11]] [#allocation8]
          $region47: #{tpu_custom_call.1} parent=40 // pred_fallthru
            _
          %218 = shalt.err (0)
          %s220 = sshll.u32 %s212, 4
          %s221 = int_to_ptr.vmem [resolvable:$true] %s220
          %223 = dma.hbm_to_vmem [thread:$0]  %s211, 16, %s221, [#allocation3]
        $region41: #{tpu_custom_call.1} parent=35 // loop_footer
          %s207 = sadd.s32 1, %s203
        $region42: #{tpu_custom_call.1} parent=35 // loop_footer_branch
          %202 = sbr.rel target = $region38
        $region43: #{tpu_custom_call.1} parent=35 // loop_exit
          _
        loop: start=0, step=1, limit=8
        $region48: #{tpu_custom_call.1} parent=35 // loop_pre_header
          _
        $region49: #{tpu_custom_call.1} parent=35 // loop_header
          %s225 = sphi 0, %s229
          %p226 = scmp.ge.s32.totalorder %s225, 8
        $region50: #{tpu_custom_call.1} parent=35 // loop_header_branch
          %228 = sbr.rel (%p226) target = $region54
        $region51: #{tpu_custom_call.1} parent=35 // loop_body
          %s230 = smul.u32 1, 1
          %s231 = sshll.u32 %s230, 4
          %232 = dma.done [#allocation3], %s231
        $region52: #{tpu_custom_call.1} parent=35 // loop_footer
          %s229 = sadd.s32 1, %s225
        $region53: #{tpu_custom_call.1} parent=35 // loop_footer_branch
          %224 = sbr.rel target = $region49
        $region54: #{tpu_custom_call.1} parent=35 // loop_exit
          _
        %v233 = vld [vmem:[#allocation2] sm:$0xff]
        %v234 = vld [vmem:[%s200] sm:$0xff]
        %vm235 = vcmp.eq.s32.totalorder %v234, 0
        %v236 = vld [vmem:[%s3] sm:$0x1]
        %v237 = vld [vmem:[%s3 + $0x1] sm:$0x1]
        %v238 = vsel %vm235, 1, 0
        %239 = vset.pattern.permute.xlu0 0
        %240 = vperm.xlu0 %239, %v238
        %v241 = vpop.permute.xlu0 %240
        %vm242 = vcmp.eq.s32.totalorder %v241, 1
        %v243 = vlaneseq
        %v244 = vshrl.u32 %v243, 7
        %v245 = vsub.s32 0, %v244
        %v246 = vrot.slane %v236, %v245
        %v247 = vlaneseq
        %v248 = vshrl.u32 %v247, 7
        %v249 = vsub.s32 0, %v248
        %v250 = vrot.slane %v237, %v249
        %v251 = vsel %vm242, %v246, %v250
        %v252 = vadd.f32 %v233, %v251
        %253 = vadd.xlane.f32.xlu0 %v252
        %v254 = vpop.xlane.xlu0 %253
        %v255 = vrcp.pop 128.0
        %v256 = vmul.f32 %v254, %v255
        %v257 = vsub.f32 %v252, %v256
        %v258 = vmul.f32 %v257, %v257
        %259 = vadd.xlane.f32.xlu0 %v258
        %v260 = vpop.xlane.xlu0 %259
        %v261 = vmul.f32 %v260, %v255
        %v262 = vadd.f32 %v261, 1e-12
        %v263 = vrsqrt.pop %v262
        %v264 = vmul.f32 %v257, %v263
        %v265 = vld [vmem:[%s4] sm:$0x1]
        %v267 = vlaneseq
        %v268 = vshrl.u32 %v267, 7
        %v269 = vsub.s32 0, %v268
        %v270 = vrot.slane %v265, %v269
        %v272 = vmul.f32 %v264, %v270
        %v273 = vld [vmem:[%s5] sm:$0x1]
        %v275 = vlaneseq
        %v276 = vshrl.u32 %v275, 7
        %v277 = vsub.s32 0, %v276
        %v278 = vrot.slane %v273, %v277
        %v280 = vadd.f32 %v272, %v278
        %281 = vst [vmem:[%s196] sm:$0xff] %v280
        %s282 = sand.u32 %s123, 1
        %s283 = scalar_lea.sflag [#allocation7], %s282
        %s284 = sand.u32 %s123, 1
        %s285 = smul.addr %s284, 8
        %s286 = scalar_lea.vmem [#allocation6], %s285
        // Predicated region
        $region55: #{tpu_custom_call.1} parent=35 // pred_check
          %p287 = pneg %p133
        $region56: #{tpu_custom_call.1} parent=35 // pred_check_branch
          %289 = sbr.rel (%p287) target = $region58
        $region57: #{tpu_custom_call.1} parent=35 // pred_region
          %s291 = ssub.s32 128, 128
          %292 = vsyncadd %s283, %s291
          %s293 = smul.addr %s26, 128
          %s294 = scalar_lea.hbm %s6, %s293
          %s296 = sshll.u32 %s286, 4
          %s297 = int_to_ptr.vmem [resolvable:$true] %s296
          %299 = dma.vmem_to_hbm [thread:$0]  %s297, 128, %s294, %s283
        $region58: #{tpu_custom_call.1} parent=35 // pred_fallthru
          _
      $region36: #{tpu_custom_call.1} parent=5 // pred_fallthru
        _
      %p300 = scmp.le.s32.totalorder 2, %s21
      // Predicated region
      $region59: #{tpu_custom_call.1} parent=5 // pred_check
        %p301 = pneg %p300
      $region60: #{tpu_custom_call.1} parent=5 // pred_check_branch
        %303 = sbr.rel (%p301) target = $region62
      $region61: #{tpu_custom_call.1} parent=5 // pred_region
        %s304 = ssub.s32 %s21, 2
        // Predicated region
        $region63: #{tpu_custom_call.1} parent=61 // pred_check
          %p305 = pneg %p139
        $region64: #{tpu_custom_call.1} parent=61 // pred_check_branch
          %307 = sbr.rel (%p305) target = $region66
        $region65: #{tpu_custom_call.1} parent=61 // pred_region
          %s308 = sand.u32 %s124, 1
          %s309 = scalar_lea.sflag [#allocation7], %s308
          %s310 = sand.u32 %s124, 1
          %s311 = smul.addr %s310, 8
          %s312 = scalar_lea.vmem [#allocation6], %s311
          %313 = dma.done %s309, 128
        $region66: #{tpu_custom_call.1} parent=61 // pred_fallthru
          _
      $region62: #{tpu_custom_call.1} parent=5 // pred_fallthru
        _
    $region6: #{tpu_custom_call.1} parent=1 // loop_footer
      %s25 = sadd.s32 1, %s21
    $region7: #{tpu_custom_call.1} parent=1 // loop_footer_branch
      %20 = sbr.rel target = $region3
    $region8: #{tpu_custom_call.1} parent=1 // loop_exit
      _
    %314 = vsyncpa [#allocation7], 1
    %s315 = scalar_lea.sflag [#allocation7], 1
    %316 = vsyncpa %s315, 1
  %317 = vsyncmov [#allocation3]
  %s318 = vpop.sfrf %317
  %p319 = scmp.eq.s32.totalorder %s318, 0
  %p320 = pneg %p319
  %322 = shalt.err (%p320)

</llo_original>
